<compile_context>
chip_gen: v7x
topology: tpu7x:2x2x1
jax: 0.10.0
libtpu: 0.0.40
codegen_flags: <defaults>
</compile_context>

<pallas_src>
import jax
import jax.numpy as jnp
from jax import lax
from jax.experimental import pallas as pl
from jax.experimental.pallas import tpu as pltpu


_TB_MAX = 256                      # max output rows per grid step
_VMEM_TABLE_BYTES_MAX = 48 << 20   # keep table VMEM-resident below this


def _round_up(x: int, m: int) -> int:
    return ((x + m - 1) // m) * m


def _gather_tile_kernel(labels_ref, table_ref, out_ref):
    """Gather TB embedding rows out of the VMEM-resident table.

    labels_ref: (B_pad,) int32 in SMEM (scalar prefetch).
    table_ref : (vocab, H) in VMEM -- whole table, resident across the grid.
    out_ref   : (TB, H)    in VMEM -- one sublane/lane-dense output tile.
    """
    tb = out_ref.shape[0]
    base = pl.program_id(0) * tb

    def body(r, carry):
        lbl = labels_ref[base + r]                                # SMEM scalar read
        out_ref[pl.ds(r, 1), :] = table_ref[pl.ds(lbl, 1), :]    # dynamic 1-row copy
        return carry

    # Short tiles unroll fully (gives the LLO scheduler visibility); larger
    # tiles stay as a loop to keep code size bounded.
    lax.fori_loop(0, tb, body, 0, unroll=tb <= 32)


@jax.jit
def _label_embed_pallas(labels, table):
    """table[labels] via a single-pass, VMEM-resident-table Pallas gather."""
    b = labels.shape[0]
    vocab, hidden = table.shape

    # Clamp: in-kernel dynamic indexing has no runtime bounds check on TPU,
    # so out-of-range labels must never reach the kernel.
    labels = jnp.clip(labels.astype(jnp.int32), 0, vocab - 1)

    # Sublane-dense batch tiling: pad B to a multiple of 8 and emit (TB, H)
    # output tiles.  Padded rows gather row 0 and are sliced off afterwards.
    tb = min(_TB_MAX, _round_up(b, 8))
    b_pad = _round_up(b, tb)
    if b_pad != b:
        labels = jnp.pad(labels, (0, b_pad - b))
    n_tiles = b_pad // tb

    grid_spec = pltpu.PrefetchScalarGridSpec(
        num_scalar_prefetch=1,
        grid=(n_tiles,),
        in_specs=[
            # Whole embedding table, constant block index -> DMA'd to VMEM
            # once and resident for every grid step.
            pl.BlockSpec((vocab, hidden), lambda i, lbl_ref: (0, 0)),
        ],
        out_specs=pl.BlockSpec((tb, hidden), lambda i, lbl_ref: (i, 0)),
    )

    # Size VMEM from the actual footprint (table + double-buffered output
    # tiles + headroom); v7x scoped default is 32 MiB / 64 MiB physical,
    # v5e default is 16 MiB.
    itemsize = jnp.dtype(table.dtype).itemsize
    vmem_needed = (2 * vocab * hidden + 4 * tb * hidden) * itemsize + (4 << 20)
    vmem_limit = int(min(max(vmem_needed, 32 << 20), 64 << 20))

    out = pl.pallas_call(
        _gather_tile_kernel,
        out_shape=jax.ShapeDtypeStruct((b_pad, hidden), table.dtype),
        grid_spec=grid_spec,
        compiler_params=pltpu.CompilerParams(
            dimension_semantics=("arbitrary",),
            vmem_limit_bytes=vmem_limit,
        ),
    )(labels, table)
    return out[:b]


def label_embed(labels, table):
    """table[labels] row gather; dispatches to the Pallas kernel when it pays off."""
    vocab, hidden = table.shape
    table_bytes = vocab * hidden * jnp.dtype(table.dtype).itemsize
    if hidden % 128 != 0 or table_bytes > _VMEM_TABLE_BYTES_MAX:
        # Lane-sparse hidden sizes: XLA's native gather beats the Pallas
        # launch.  VMEM-oversized vocabularies also take this path.
        # TODO(synk): for VMEM-oversized tables a manual DMA gather
        # (memory_space=pl.ANY + make_async_copy double-buffer, TB rows per
        # step) would read only the B needed HBM rows; not needed at DiT scale.
        idx = jnp.clip(labels.astype(jnp.int32), 0, vocab - 1)
        return jnp.take(table, idx, axis=0)
    return _label_embed_pallas(labels, table)


class LabelEmbedder:
    """JAX / Pallas port of the PyTorch DiT LabelEmbedder forward pass."""

    def __init__(self, num_classes: int, hidden_size: int,
                 dropout_prob: float = 0.1, *, param_key=None,
                 dtype=jnp.float32):
        self.num_classes = num_classes
        self.hidden_size = hidden_size
        self.dropout_prob = dropout_prob
        use_cfg_embedding = dropout_prob > 0
        self.vocab = num_classes + int(use_cfg_embedding)
        if param_key is None:
            param_key = jax.random.PRNGKey(42)
        # nn.Embedding default init: weight ~ N(0, 1).  Keep float32 to match
        # PyTorch numerics; pass dtype=jnp.bfloat16 to halve HBM/VMEM traffic.
        self.embedding_table = jax.random.normal(
            param_key, (self.vocab, hidden_size)).astype(dtype)

    def token_drop(self, labels, rng=None, force_drop_ids=None):
        if force_drop_ids is None:
            if rng is None:
                raise ValueError(
                    "token_drop with dropout_prob > 0 needs an explicit `rng` "
                    "key (JAX has no global RNG like torch.rand).")
            drop_ids = jax.random.uniform(rng, (labels.shape[0],)) < self.dropout_prob
        else:
            drop_ids = force_drop_ids == 1
        return jnp.where(drop_ids, self.num_classes, labels)

    def __call__(self, labels, train: bool = True, force_drop_ids=None, rng=None):
        use_dropout = self.dropout_prob > 0
        if (train and use_dropout) or (force_drop_ids is not None):
            labels = self.token_drop(labels, rng=rng, force_drop_ids=force_drop_ids)
        return label_embed(labels, self.embedding_table)


if __name__ == "__main__":
    num_classes = 16
    hidden_size = 128   # lane-dense output (multiple of 128); real DiT uses 1152
    batch = 8

    root = jax.random.PRNGKey(0)
    k_labels, k_drop, k_params = jax.random.split(root, 3)

    labels = jax.random.randint(k_labels, (batch,), 0, num_classes, dtype=jnp.int32)

    embedder = LabelEmbedder(num_classes, hidden_size, dropout_prob=0.1,
                             param_key=k_params)

    # Forward with training-time label dropout (classifier-free guidance).
    out = jax.block_until_ready(embedder(labels, train=True, rng=k_drop))

    # Reference check (pure JAX): same dropout decision, plain gather.
    dropped_labels = embedder.token_drop(labels, rng=k_drop)
    ref = embedder.embedding_table[dropped_labels]
    assert out.shape == (batch, hidden_size)
    assert jnp.allclose(out, ref, atol=1e-6, rtol=1e-6)

    # Eval mode (no dropout).
    out_eval = jax.block_until_ready(embedder(labels, train=False))
    assert jnp.allclose(out_eval, embedder.embedding_table[labels], atol=1e-6)

    # force_drop_ids path (labels forced to the CFG null class).
    force = jnp.array([1, 0, 1, 0, 0, 0, 0, 1], dtype=jnp.int32)
    out_force = jax.block_until_ready(
        embedder(labels, train=False, force_drop_ids=force)
    )
    forced_labels = jnp.where(force == 1, num_classes, labels)
    assert jnp.allclose(out_force, embedder.embedding_table[forced_labels], atol=1e-6)

    # Non-multiple-of-8 batch exercises the sublane padding path.
    labels5 = labels[:5]
    out5 = jax.block_until_ready(embedder(labels5, train=False))
    assert out5.shape == (5, hidden_size)
    assert jnp.allclose(out5, embedder.embedding_table[labels5], atol=1e-6)

    print("KERNEL_OK")
</pallas_src>

<mosaic_0001>
module attributes {stable_mosaic.version = 11 : i64} {
  func.func @_gather_tile_kernel(%arg0: i32, %arg1: memref<8xi32, #tpu.memory_space<smem>>, %arg2: memref<17x128xf32, #tpu.memory_space<vmem>>, %arg3: memref<8x128xf32, #tpu.memory_space<vmem>>) attributes {dimension_semantics = [#tpu.dimension_semantics<arbitrary>], iteration_bounds = array<i64: 1>, scalar_prefetch = 1 : i64, scratch_operands = 0 : i64, tpu.core_type = #tpu.core_type<tc>, window_params = [{pipeline_mode = #tpu.pipeline_mode<synchronous>, transform_indices = @transform_0, window_bounds = array<i64: 17, 128>}, {transform_indices = @transform_1, window_bounds = array<i64: 8, 128>}]} {
    %c8_i32 = arith.constant 8 : i32
    %0 = arith.muli %arg0, %c8_i32 : i32
    %c0_i32 = arith.constant 0 : i32
    %1 = arith.addi %0, %c0_i32 : i32
    %2 = arith.index_cast %1 : i32 to index
    %3 = memref.load %arg1[%2] : memref<8xi32, #tpu.memory_space<smem>>
    %4 = arith.index_cast %3 : i32 to index
    %c0 = arith.constant 0 : index
    %5 = vector.load %arg2[%4, %c0] : memref<17x128xf32, #tpu.memory_space<vmem>>, vector<1x128xf32>
    %6 = arith.index_cast %c0_i32 : i32 to index
    %c0_0 = arith.constant 0 : index
    %7 = vector.load %arg3[%6, %c0_0] : memref<8x128xf32, #tpu.memory_space<vmem>>, vector<1x128xf32>
    tpu.vector_store %arg3[%6, %c0_0], %5 {strides = array<i32>} : memref<8x128xf32, #tpu.memory_space<vmem>>, vector<1x128xf32>,
    %c1_i32 = arith.constant 1 : i32
    %8 = arith.addi %0, %c1_i32 : i32
    %9 = arith.index_cast %8 : i32 to index
    %10 = memref.load %arg1[%9] : memref<8xi32, #tpu.memory_space<smem>>
    %11 = arith.index_cast %10 : i32 to index
    %c0_1 = arith.constant 0 : index
    %12 = vector.load %arg2[%11, %c0_1] : memref<17x128xf32, #tpu.memory_space<vmem>>, vector<1x128xf32>
    %13 = arith.index_cast %c1_i32 : i32 to index
    %c0_2 = arith.constant 0 : index
    %14 = vector.load %arg3[%13, %c0_2] : memref<8x128xf32, #tpu.memory_space<vmem>>, vector<1x128xf32>
    tpu.vector_store %arg3[%13, %c0_2], %12 {strides = array<i32>} : memref<8x128xf32, #tpu.memory_space<vmem>>, vector<1x128xf32>,
    %c2_i32 = arith.constant 2 : i32
    %15 = arith.addi %0, %c2_i32 : i32
    %16 = arith.index_cast %15 : i32 to index
    %17 = memref.load %arg1[%16] : memref<8xi32, #tpu.memory_space<smem>>
    %18 = arith.index_cast %17 : i32 to index
    %c0_3 = arith.constant 0 : index
    %19 = vector.load %arg2[%18, %c0_3] : memref<17x128xf32, #tpu.memory_space<vmem>>, vector<1x128xf32>
    %20 = arith.index_cast %c2_i32 : i32 to index
    %c0_4 = arith.constant 0 : index
    %21 = vector.load %arg3[%20, %c0_4] : memref<8x128xf32, #tpu.memory_space<vmem>>, vector<1x128xf32>
    tpu.vector_store %arg3[%20, %c0_4], %19 {strides = array<i32>} : memref<8x128xf32, #tpu.memory_space<vmem>>, vector<1x128xf32>,
    %c3_i32 = arith.constant 3 : i32
    %22 = arith.addi %0, %c3_i32 : i32
    %23 = arith.index_cast %22 : i32 to index
    %24 = memref.load %arg1[%23] : memref<8xi32, #tpu.memory_space<smem>>
    %25 = arith.index_cast %24 : i32 to index
    %c0_5 = arith.constant 0 : index
    %26 = vector.load %arg2[%25, %c0_5] : memref<17x128xf32, #tpu.memory_space<vmem>>, vector<1x128xf32>
    %27 = arith.index_cast %c3_i32 : i32 to index
    %c0_6 = arith.constant 0 : index
    %28 = vector.load %arg3[%27, %c0_6] : memref<8x128xf32, #tpu.memory_space<vmem>>, vector<1x128xf32>
    tpu.vector_store %arg3[%27, %c0_6], %26 {strides = array<i32>} : memref<8x128xf32, #tpu.memory_space<vmem>>, vector<1x128xf32>,
    %c4_i32 = arith.constant 4 : i32
    %29 = arith.addi %0, %c4_i32 : i32
    %30 = arith.index_cast %29 : i32 to index
    %31 = memref.load %arg1[%30] : memref<8xi32, #tpu.memory_space<smem>>
    %32 = arith.index_cast %31 : i32 to index
    %c0_7 = arith.constant 0 : index
    %33 = vector.load %arg2[%32, %c0_7] : memref<17x128xf32, #tpu.memory_space<vmem>>, vector<1x128xf32>
    %34 = arith.index_cast %c4_i32 : i32 to index
    %c0_8 = arith.constant 0 : index
    %35 = vector.load %arg3[%34, %c0_8] : memref<8x128xf32, #tpu.memory_space<vmem>>, vector<1x128xf32>
    tpu.vector_store %arg3[%34, %c0_8], %33 {strides = array<i32>} : memref<8x128xf32, #tpu.memory_space<vmem>>, vector<1x128xf32>,
    %c5_i32 = arith.constant 5 : i32
    %36 = arith.addi %0, %c5_i32 : i32
    %37 = arith.index_cast %36 : i32 to index
    %38 = memref.load %arg1[%37] : memref<8xi32, #tpu.memory_space<smem>>
    %39 = arith.index_cast %38 : i32 to index
    %c0_9 = arith.constant 0 : index
    %40 = vector.load %arg2[%39, %c0_9] : memref<17x128xf32, #tpu.memory_space<vmem>>, vector<1x128xf32>
    %41 = arith.index_cast %c5_i32 : i32 to index
    %c0_10 = arith.constant 0 : index
    %42 = vector.load %arg3[%41, %c0_10] : memref<8x128xf32, #tpu.memory_space<vmem>>, vector<1x128xf32>
    tpu.vector_store %arg3[%41, %c0_10], %40 {strides = array<i32>} : memref<8x128xf32, #tpu.memory_space<vmem>>, vector<1x128xf32>,
    %c6_i32 = arith.constant 6 : i32
    %43 = arith.addi %0, %c6_i32 : i32
    %44 = arith.index_cast %43 : i32 to index
    %45 = memref.load %arg1[%44] : memref<8xi32, #tpu.memory_space<smem>>
    %46 = arith.index_cast %45 : i32 to index
    %c0_11 = arith.constant 0 : index
    %47 = vector.load %arg2[%46, %c0_11] : memref<17x128xf32, #tpu.memory_space<vmem>>, vector<1x128xf32>
    %48 = arith.index_cast %c6_i32 : i32 to index
    %c0_12 = arith.constant 0 : index
    %49 = vector.load %arg3[%48, %c0_12] : memref<8x128xf32, #tpu.memory_space<vmem>>, vector<1x128xf32>
    tpu.vector_store %arg3[%48, %c0_12], %47 {strides = array<i32>} : memref<8x128xf32, #tpu.memory_space<vmem>>, vector<1x128xf32>,
    %c7_i32 = arith.constant 7 : i32
    %50 = arith.addi %0, %c7_i32 : i32
    %51 = arith.index_cast %50 : i32 to index
    %52 = memref.load %arg1[%51] : memref<8xi32, #tpu.memory_space<smem>>
    %53 = arith.index_cast %52 : i32 to index
    %c0_13 = arith.constant 0 : index
    %54 = vector.load %arg2[%53, %c0_13] : memref<17x128xf32, #tpu.memory_space<vmem>>, vector<1x128xf32>
    %55 = arith.index_cast %c7_i32 : i32 to index
    %c0_14 = arith.constant 0 : index
    %56 = vector.load %arg3[%55, %c0_14] : memref<8x128xf32, #tpu.memory_space<vmem>>, vector<1x128xf32>
    tpu.vector_store %arg3[%55, %c0_14], %54 {strides = array<i32>} : memref<8x128xf32, #tpu.memory_space<vmem>>, vector<1x128xf32>,
    %c8_i32_15 = arith.constant 8 : i32
    return
  }
  func.func @transform_0(%arg0: i32, %arg1: memref<8xi32, #tpu.memory_space<smem>>) -> (i32, i32) {
    %c0_i32 = arith.constant 0 : i32
    %c0_i32_0 = arith.constant 0 : i32
    %c0_i32_1 = arith.constant 0 : i32
    return %c0_i32, %c0_i32_0 : i32, i32
  }
  func.func @transform_1(%arg0: i32, %arg1: memref<8xi32, #tpu.memory_space<smem>>) -> (i32, i32) {
    %c0_i32 = arith.constant 0 : i32
    %c0_i32_0 = arith.constant 0 : i32
    return %arg0, %c0_i32 : i32, i32
  }
}

</mosaic_0001>

<llo_original>
// kernel: _label_embed_pallas.1
$region0: #{_label_embed_pallas.1}
  #allocation0 [shape = 'u32[]', space=smem, size = 0x4, offset = 0x4, fixed_abs, tag = 'smem constant byte address 0x4 - core index']
  #allocation1 [shape = 'u32[144,128]{1,0:T(1,128)}', space=vmem, size = 0x12000, scoped, tag = 'internal scratch']
  #allocation2 [shape = 's32[1]{0}', space=sflag, size = 0x4, scoped, tag = 'scoped memory for _label_embed_pallas.1']
  #allocation3 [shape = 'u8[512]{0}', space=smem, size = 0x200, scoped, tag = 'prefetched SMEM operand 0']
  %s0 = inlined_call_operand.vmem [shape: s32[8], index: 0, kind: input, shape index: {}]
  %s1 = inlined_call_operand.hbm [shape: f32[17,128], index: 1, kind: input, shape index: {}]
  %s2 = inlined_call_operand.hbm [shape: f32[8,128], index: 2, kind: output, shape index: {}]
  %s3 = sld [smem:[#allocation0]]
  $region18: #{_label_embed_pallas.1} parent=0
    _
  %s5 = ssub.s32 1, %s3
  %s6 = scalar_select 0, %s5, %s3
  %s7 = sshll.u32 %s0, 4
  %s8 = int_to_ptr.vmem [resolvable:$true] %s7
  %10 = dma.vmem_to_smem %s8, 16, [#allocation3], [#allocation2]
  %11 = dma.done [#allocation2], 16
  %12 = sfence
  $region1: #{_label_embed_pallas.1} parent=0
    #allocation4 [shape = 'u8[12288]{0}', space=vmem, size = 0x3000, scoped, tag = 'input window, operand 1, single buffered']
    #allocation5 [shape = 's32[1]{0}', space=sflag, size = 0x4, scoped, tag = 'scoped memory for _label_embed_pallas.1']
    #allocation6 [shape = 's32[1]{0}', space=sflag, size = 0x4, scoped, tag = 'scoped memory for _label_embed_pallas.1']
    #allocation7 [shape = 'u8[4096]{0}', space=vmem, size = 0x1000, scoped, tag = 'output window, operand 0, single buffered']
    %13 = vsyncpa [#allocation5], 0
    %14 = vsyncpa [#allocation6], 0
    // Predicated region
    $region2: #{_label_embed_pallas.1} parent=1 // pred_check
      _
    $region3: #{_label_embed_pallas.1} parent=1 // pred_check_branch
      %16 = sbr.rel (0) target = $region5
    $region4: #{_label_embed_pallas.1} parent=1 // pred_region
      %s18 = ssub.s32 384, 384
      %19 = vsyncadd [#allocation5], %s18
      %s20 = sshll.u32 [#allocation4], 4
      %s21 = int_to_ptr.vmem [resolvable:$true] %s20
      %26 = dma.hbm_to_vmem [thread:$0]  %s1, 384, %s21, [#allocation5], 128, 128, 8
    $region5: #{_label_embed_pallas.1} parent=1 // pred_fallthru
      _
    // Predicated region
    $region6: #{_label_embed_pallas.1} parent=1 // pred_check
      _
    $region7: #{_label_embed_pallas.1} parent=1 // pred_check_branch
      %28 = sbr.rel (0) target = $region9
    $region8: #{_label_embed_pallas.1} parent=1 // pred_region
      %29 = dma.done [#allocation5], 384
    $region9: #{_label_embed_pallas.1} parent=1 // pred_fallthru
      _
    %s30 = smul.u32 0, 8
    %s31 = sld [smem:[#allocation3 + %s30]]
    %s32 = scalar_lea.vmem [#allocation4], %s31
    %v33 = vld [vmem:[%s32] sm:$0x1]
    %34 = vst [vmem:[#allocation7] sm:$0x1] %v33
    %s35 = sadd.s32 %s30, 1
    %s36 = sld [smem:[#allocation3 + %s35]]
    %s37 = scalar_lea.vmem [#allocation4], %s36
    %v38 = vld [vmem:[%s37] sm:$0x1]
    %39 = vst [vmem:[#allocation7 + $0x1] sm:$0x1] %v38
    %s40 = sadd.s32 %s30, 2
    %s41 = sld [smem:[#allocation3 + %s40]]
    %s42 = scalar_lea.vmem [#allocation4], %s41
    %v43 = vld [vmem:[%s42] sm:$0x1]
    %44 = vst [vmem:[#allocation7 + $0x2] sm:$0x1] %v43
    %s45 = sadd.s32 %s30, 3
    %s46 = sld [smem:[#allocation3 + %s45]]
    %s47 = scalar_lea.vmem [#allocation4], %s46
    %v48 = vld [vmem:[%s47] sm:$0x1]
    %49 = vst [vmem:[#allocation7 + $0x3] sm:$0x1] %v48
    %s50 = sadd.s32 %s30, 4
    %s51 = sld [smem:[#allocation3 + %s50]]
    %s52 = scalar_lea.vmem [#allocation4], %s51
    %v53 = vld [vmem:[%s52] sm:$0x1]
    %54 = vst [vmem:[#allocation7 + $0x4] sm:$0x1] %v53
    %s55 = sadd.s32 %s30, 5
    %s56 = sld [smem:[#allocation3 + %s55]]
    %s57 = scalar_lea.vmem [#allocation4], %s56
    %v58 = vld [vmem:[%s57] sm:$0x1]
    %59 = vst [vmem:[#allocation7 + $0x5] sm:$0x1] %v58
    %s60 = sadd.s32 %s30, 6
    %s61 = sld [smem:[#allocation3 + %s60]]
    %s62 = scalar_lea.vmem [#allocation4], %s61
    %v63 = vld [vmem:[%s62] sm:$0x1]
    %64 = vst [vmem:[#allocation7 + $0x6] sm:$0x1] %v63
    %s65 = sadd.s32 %s30, 7
    %s66 = sld [smem:[#allocation3 + %s65]]
    %s67 = scalar_lea.vmem [#allocation4], %s66
    %v68 = vld [vmem:[%s67] sm:$0x1]
    %69 = vst [vmem:[#allocation7 + $0x7] sm:$0x1] %v68
    // Predicated region
    $region10: #{_label_embed_pallas.1} parent=1 // pred_check
      _
    $region11: #{_label_embed_pallas.1} parent=1 // pred_check_branch
      %71 = sbr.rel (0) target = $region13
    $region12: #{_label_embed_pallas.1} parent=1 // pred_region
      %s73 = ssub.s32 128, 128
      %74 = vsyncadd [#allocation6], %s73
      %s76 = sshll.u32 [#allocation7], 4
      %s77 = int_to_ptr.vmem [resolvable:$true] %s76
      %79 = dma.vmem_to_hbm [thread:$0]  %s77, 128, %s2, [#allocation6]
    $region13: #{_label_embed_pallas.1} parent=1 // pred_fallthru
      _
    // Predicated region
    $region14: #{_label_embed_pallas.1} parent=1 // pred_check
      _
    $region15: #{_label_embed_pallas.1} parent=1 // pred_check_branch
      %81 = sbr.rel (0) target = $region17
    $region16: #{_label_embed_pallas.1} parent=1 // pred_region
      %82 = dma.done [#allocation6], 128
    $region17: #{_label_embed_pallas.1} parent=1 // pred_fallthru
      _
    %83 = vsyncpa [#allocation5], 1
    %84 = vsyncpa [#allocation6], 1

</llo_original>
